<compile_context>
chip_gen: v5e
topology: v5e:2x2
jax: 0.10.0
libtpu: 0.0.40
codegen_flags: <defaults>
</compile_context>

<pallas_src>
import jax
import jax.numpy as jnp
from jax.experimental import pallas as pl
from jax.experimental.pallas import tpu as pltpu


def _one_hot_embed_kernel(ids_ref, w_ref, emb_ref, oh_ref):
    # ids_ref: (tm, 1) int32 ; w_ref: (V, D) f32 (already cast in wrapper)
    # outputs (in out_specs order): emb_ref (tm, D) f32, oh_ref (tm, V) f32
    ids = ids_ref[...]                                   # (tm, 1)
    tm, V = oh_ref.shape
    col = jax.lax.broadcasted_iota(jnp.int32, (tm, V), 1)
    one_hots = (col == ids).astype(jnp.float32)          # (tm, V)
    oh_ref[...] = one_hots
    # Tiny matmul; not the bottleneck (kernel is HBM-write bound), keep on MXU.
    emb_ref[...] = jnp.dot(one_hots, w_ref[...],
                           preferred_element_type=jnp.float32)  # (tm, D)


def _pick_tm(N, V, D, vmem_budget_bytes=24 * 1024 * 1024):
    """Largest row tile (multiple of 8, divides N, <= 2048, fits VMEM budget),
    preferring a grid length >= 2 so v7x megacore gets both TensorCores."""
    pad = lambda n: ((n + 127) // 128) * 128
    # double-buffered ids + one_hots + emb tiles, lane-padded to 128, f32/int32
    row_bytes = 4 * (pad(1) + pad(V) + pad(D)) * 2
    cap = max(8, vmem_budget_bytes // row_bytes)
    target = min(2048, cap, N)
    cands = [t for t in range(8, target + 1, 8) if N % t == 0]
    if not cands:
        return N                      # small / irregular N: single full tile
    multi = [t for t in cands if N // t >= 2]
    return max(multi) if multi else max(cands)


def one_hot_embedding(input_ids: jax.Array, weight: jax.Array, *,
                      tm: int | None = None,
                      vmem_limit_bytes: int = 32 * 1024 * 1024):
    """Returns (embeddings [B, L, D], one_hots [B, L, V] float32)."""
    B, L = input_ids.shape
    V, D = weight.shape
    N = B * L

    # Amino-acid token ids are tiny (< V), so the int32 cast is lossless.
    ids_flat = input_ids.reshape(N, 1).astype(jnp.int32)
    w_f32 = weight.astype(jnp.float32)     # matmul is done in f32 (as PyTorch)

    tm = _pick_tm(N, V, D) if tm is None else tm
    assert N % tm == 0, "B*L must be divisible by the row tile"
    assert tm % 8 == 0 or tm == N, "row tile must be a multiple of 8 (or == N)"

    grid = (N // tm,)
    emb_flat, oh_flat = pl.pallas_call(
        _one_hot_embed_kernel,
        out_shape=(
            jax.ShapeDtypeStruct((N, D), jnp.float32),   # embeddings
            jax.ShapeDtypeStruct((N, V), jnp.float32),   # one_hots
        ),
        grid_spec=pltpu.PrefetchScalarGridSpec(
            num_scalar_prefetch=0,
            grid=grid,
            in_specs=[
                pl.BlockSpec((tm, 1), lambda i: (i, 0)),   # ids tile
                pl.BlockSpec((V, D), lambda i: (0, 0)),    # full weight
            ],
            out_specs=(
                pl.BlockSpec((tm, D), lambda i: (i, 0)),   # embeddings tile
                pl.BlockSpec((tm, V), lambda i: (i, 0)),   # one_hots tile
            ),
        ),
        compiler_params=pltpu.CompilerParams(
            dimension_semantics=("parallel",),
            vmem_limit_bytes=vmem_limit_bytes),
    )(ids_flat, w_f32)

    embeddings = emb_flat.reshape(B, L, D)
    one_hots = oh_flat.reshape(B, L, V)
    # Match PyTorch: cast embeddings back to the (half-precision) weight dtype.
    if weight.dtype in (jnp.float16, jnp.bfloat16):
        embeddings = embeddings.astype(weight.dtype)
    return embeddings, one_hots


if __name__ == "__main__":
    B, L = 2, 8          # batch, max_sequence_len
    V, D = 24, 32        # vocab (num amino-acid tokens), embedding_dim

    key = jax.random.PRNGKey(0)
    k_ids, k_w = jax.random.split(key)
    input_ids = jax.random.randint(k_ids, (B, L), minval=0, maxval=V,
                                   dtype=jnp.int32)
    weight = jax.random.normal(k_w, (V, D), dtype=jnp.float32)

    embeddings, one_hots = one_hot_embedding(input_ids, weight)
    embeddings = jax.block_until_ready(embeddings)
    one_hots = jax.block_until_ready(one_hots)

    # Reference check in plain JAX.
    ref_oh = jax.nn.one_hot(input_ids, V, dtype=jnp.float32)
    ref_emb = ref_oh @ weight
    assert embeddings.shape == (B, L, D)
    assert one_hots.shape == (B, L, V)
    assert jnp.allclose(one_hots, ref_oh)
    assert jnp.allclose(embeddings, ref_emb, atol=1e-5, rtol=1e-5)

    print("KERNEL_OK")
</pallas_src>

<mosaic_0001>
module attributes {stable_mosaic.version = 11 : i64} {
  func.func @_one_hot_embed_kernel(%arg0: i32, %arg1: memref<8x1xi32, #tpu.memory_space<vmem>>, %arg2: memref<24x32xf32, #tpu.memory_space<vmem>>, %arg3: memref<8x32xf32, #tpu.memory_space<vmem>>, %arg4: memref<8x24xf32, #tpu.memory_space<vmem>>) attributes {dimension_semantics = [#tpu.dimension_semantics<parallel>], iteration_bounds = array<i64: 2>, scalar_prefetch = 0 : i64, scratch_operands = 0 : i64, tpu.core_type = #tpu.core_type<tc>, window_params = [{transform_indices = @transform_0, window_bounds = array<i64: 8, 1>}, {pipeline_mode = #tpu.pipeline_mode<synchronous>, transform_indices = @transform_1, window_bounds = array<i64: 24, 32>}, {transform_indices = @transform_2, window_bounds = array<i64: 8, 32>}, {transform_indices = @transform_3, window_bounds = array<i64: 8, 24>}]} {
    %c0 = arith.constant 0 : index
    %c0_0 = arith.constant 0 : index
    %0 = vector.load %arg1[%c0, %c0_0] : memref<8x1xi32, #tpu.memory_space<vmem>>, vector<8x1xi32>
    %1 = tpu.iota {dimensions = array<i32: 1>} : vector<8x24xi32>
    %2 = vector.broadcast %0 : vector<8x1xi32> to vector<8x24xi32>
    %3 = arith.cmpi eq, %1, %2 : vector<8x24xi32>
    %4 = arith.extui %3 : vector<8x24xi1> to vector<8x24xi32>
    %5 = arith.sitofp %4 : vector<8x24xi32> to vector<8x24xf32>
    %c0_1 = arith.constant 0 : index
    %c0_2 = arith.constant 0 : index
    %6 = vector.load %arg4[%c0_1, %c0_2] : memref<8x24xf32, #tpu.memory_space<vmem>>, vector<8x24xf32>
    tpu.vector_store %arg4[%c0_1, %c0_2], %5 {strides = array<i32>} : memref<8x24xf32, #tpu.memory_space<vmem>>, vector<8x24xf32>,
    %c0_3 = arith.constant 0 : index
    %c0_4 = arith.constant 0 : index
    %7 = vector.load %arg2[%c0_3, %c0_4] : memref<24x32xf32, #tpu.memory_space<vmem>>, vector<24x32xf32>
    %cst = arith.constant dense<0.000000e+00> : vector<8x32xf32>
    %8 = tpu.matmul %5, %7, %cst {dimension_numbers = #tpu.dot_dimension_numbers<[1], [0], [0], [1], [0, 0, 1, 1], [], []>} : vector<8x24xf32>, vector<24x32xf32>, vector<8x32xf32> -> vector<8x32xf32>
    %c0_5 = arith.constant 0 : index
    %c0_6 = arith.constant 0 : index
    %9 = vector.load %arg3[%c0_5, %c0_6] : memref<8x32xf32, #tpu.memory_space<vmem>>, vector<8x32xf32>
    tpu.vector_store %arg3[%c0_5, %c0_6], %8 {strides = array<i32>} : memref<8x32xf32, #tpu.memory_space<vmem>>, vector<8x32xf32>,
    return
  }
  func.func @transform_0(%arg0: i32) -> (i32, i32) {
    %c0_i32 = arith.constant 0 : i32
    %c0_i32_0 = arith.constant 0 : i32
    return %arg0, %c0_i32 : i32, i32
  }
  func.func @transform_1(%arg0: i32) -> (i32, i32) {
    %c0_i32 = arith.constant 0 : i32
    %c0_i32_0 = arith.constant 0 : i32
    %c0_i32_1 = arith.constant 0 : i32
    return %c0_i32, %c0_i32_0 : i32, i32
  }
  func.func @transform_2(%arg0: i32) -> (i32, i32) {
    %c0_i32 = arith.constant 0 : i32
    %c0_i32_0 = arith.constant 0 : i32
    return %arg0, %c0_i32 : i32, i32
  }
  func.func @transform_3(%arg0: i32) -> (i32, i32) {
    %c0_i32 = arith.constant 0 : i32
    %c0_i32_0 = arith.constant 0 : i32
    return %arg0, %c0_i32 : i32, i32
  }
}

</mosaic_0001>

<llo_original>
// kernel: tpu_custom_call.1
$region0: #{tpu_custom_call.1}
  #allocation0 [shape = 'u32[]', space=smem, size = 0x4, offset = 0x4, fixed_abs, tag = 'smem constant byte address 0x4 - core index']
  #allocation1 [shape = 'u32[72,128]{1,0:T(1,128)}', space=vmem, size = 0x9000, scoped, tag = 'internal scratch']
  %s0 = inlined_call_operand.vmem [shape: s32[16,1], index: 0, kind: input, shape index: {}]
  %s1 = inlined_call_operand.hbm [shape: f32[24,32], index: 1, kind: input, shape index: {}]
  %s2 = inlined_call_operand.hbm [shape: f32[16,32], index: 2, kind: output, shape index: {0}]
  %s3 = inlined_call_operand.hbm [shape: f32[16,24], index: 3, kind: output, shape index: {1}]
  %4 = xla_tuple %s2, %s3
  %s5 = sld [smem:[#allocation0]]
  $region53: #{tpu_custom_call.1} parent=0
    _
  %s7 = ssub.s32 1, %s5
  %s8 = scalar_select 0, %s7, %s5
  $region1: #{tpu_custom_call.1} parent=0
    #allocation2 [shape = 'u8[12288]{0}', space=vmem, size = 0x3000, scoped, tag = 'input window, operand 1, single buffered']
    #allocation3 [shape = 's32[2]{0}', space=sflag, size = 0x8, scoped, tag = 'scoped memory for tpu_custom_call.1']
    #allocation4 [shape = 's32[2]{0}', space=sflag, size = 0x8, scoped, tag = 'scoped memory for tpu_custom_call.1']
    #allocation5 [shape = 'u8[8192]{0}', space=vmem, size = 0x2000, scoped, tag = 'output window, operand 0']
    #allocation6 [shape = 'u8[8192]{0}', space=vmem, size = 0x2000, scoped, tag = 'output window, operand 1']
    #allocation7 [shape = 's32[2]{0}', space=sflag, size = 0x8, scoped, tag = 'scoped memory for tpu_custom_call.1']
    %9 = vsyncpa [#allocation3], 0
    %10 = vsyncpa [#allocation4], 0
    %s11 = scalar_lea.sflag [#allocation4], 1
    %12 = vsyncpa %s11, 0
    %13 = vsyncpa [#allocation7], 0
    %s14 = scalar_lea.sflag [#allocation7], 1
    %15 = vsyncpa %s14, 0
    loop: start=0, step=1, limit=4
    $region2: #{tpu_custom_call.1} parent=1 // loop_pre_header
      _
    $region3: #{tpu_custom_call.1} parent=1 // loop_header
      %s17 = sphi 0, %s21
      %p18 = scmp.ge.s32.totalorder %s17, 4
      %s27 = sphi 0, %s29
      %s30 = sphi 0, %s27
      %s31 = sphi 0, %s30
      %s47 = sphi 0, %s31
      %s51 = sphi 0, %s51
      %s53 = sphi 0, %s51
      %s54 = sphi 0, %s53
      %s68 = sphi 0, %s54
      %s74 = sphi 0, %s76
      %s77 = sphi 0, %s74
      %s78 = sphi 0, %s77
      %s94 = sphi 0, %s78
      %s100 = sphi 0, %s102
      %s103 = sphi 0, %s100
      %s104 = sphi 0, %s103
      %s120 = sphi 0, %s104
    $region4: #{tpu_custom_call.1} parent=1 // loop_header_branch
      %20 = sbr.rel (%p18) target = $region8
    $region5: #{tpu_custom_call.1} parent=1 // loop_body
      %s22 = ssub.s32 %s17, 1
      %s23 = ssub.s32 %s17, 2
      %s24 = sadd.s32 %s17, 1
      %s25 = ssub.s32 %s17, %s24
      %p26 = scmp.eq.s32.totalorder %s25, 0
      %s28 = sadd.s32 %s27, 1
      %s29 = scalar_select %p26, %s27, %s28
      %p32 = pneg %p26
      %p33 = scmp.eq.s32.totalorder %s17, 1
      %p34 = por %p32, %p33
      %p35 = scmp.ne.s32.totalorder %s27, %s30
      %p36 = scmp.eq.s32.totalorder %s17, 0
      %p37 = por %p35, %p36
      %p38 = scmp.ne.s32.totalorder %s27, %s30
      %p39 = scmp.eq.s32.totalorder %s22, 1
      %p40 = por %p38, %p39
      %p41 = scmp.ne.s32.totalorder %s30, %s31
      %p42 = scmp.eq.s32.totalorder %s22, 0
      %p43 = por %p41, %p42
      %p44 = scmp.ne.s32.totalorder %s30, %s31
      %p45 = scmp.eq.s32.totalorder %s23, 1
      %p46 = por %p44, %p45
      %p48 = scmp.ne.s32.totalorder %s31, %s47
      %p49 = scmp.eq.s32.totalorder %s23, 0
      %p50 = por %p48, %p49
      %s52 = sadd.s32 %s51, 1
      %p55 = scmp.eq.s32.totalorder %s17, 1
      %p56 = scmp.ne.s32.totalorder %s51, %s53
      %p57 = scmp.eq.s32.totalorder %s17, 0
      %p58 = por %p56, %p57
      %p59 = scmp.ne.s32.totalorder %s51, %s53
      %p60 = scmp.eq.s32.totalorder %s22, 1
      %p61 = por %p59, %p60
      %p62 = scmp.ne.s32.totalorder %s53, %s54
      %p63 = scmp.eq.s32.totalorder %s22, 0
      %p64 = por %p62, %p63
      %p65 = scmp.ne.s32.totalorder %s53, %s54
      %p66 = scmp.eq.s32.totalorder %s23, 1
      %p67 = por %p65, %p66
      %p69 = scmp.ne.s32.totalorder %s54, %s68
      %p70 = scmp.eq.s32.totalorder %s23, 0
      %p71 = por %p69, %p70
      %s72 = ssub.s32 %s17, %s24
      %p73 = scmp.eq.s32.totalorder %s72, 0
      %s75 = sadd.s32 %s74, 1
      %s76 = scalar_select %p73, %s74, %s75
      %p79 = pneg %p73
      %p80 = scmp.eq.s32.totalorder %s17, 1
      %p81 = por %p79, %p80
      %p82 = scmp.ne.s32.totalorder %s74, %s77
      %p83 = scmp.eq.s32.totalorder %s17, 0
      %p84 = por %p82, %p83
      %p85 = scmp.ne.s32.totalorder %s74, %s77
      %p86 = scmp.eq.s32.totalorder %s22, 1
      %p87 = por %p85, %p86
      %p88 = scmp.ne.s32.totalorder %s77, %s78
      %p89 = scmp.eq.s32.totalorder %s22, 0
      %p90 = por %p88, %p89
      %p91 = scmp.ne.s32.totalorder %s77, %s78
      %p92 = scmp.eq.s32.totalorder %s23, 1
      %p93 = por %p91, %p92
      %p95 = scmp.ne.s32.totalorder %s78, %s94
      %p96 = scmp.eq.s32.totalorder %s23, 0
      %p97 = por %p95, %p96
      %s98 = ssub.s32 %s17, %s24
      %p99 = scmp.eq.s32.totalorder %s98, 0
      %s101 = sadd.s32 %s100, 1
      %s102 = scalar_select %p99, %s100, %s101
      %p105 = pneg %p99
      %p106 = scmp.eq.s32.totalorder %s17, 1
      %p107 = por %p105, %p106
      %p108 = scmp.ne.s32.totalorder %s100, %s103
      %p109 = scmp.eq.s32.totalorder %s17, 0
      %p110 = por %p108, %p109
      %p111 = scmp.ne.s32.totalorder %s100, %s103
      %p112 = scmp.eq.s32.totalorder %s22, 1
      %p113 = por %p111, %p112
      %p114 = scmp.ne.s32.totalorder %s103, %s104
      %p115 = scmp.eq.s32.totalorder %s22, 0
      %p116 = por %p114, %p115
      %p117 = scmp.ne.s32.totalorder %s103, %s104
      %p118 = scmp.eq.s32.totalorder %s23, 1
      %p119 = por %p117, %p118
      %p121 = scmp.ne.s32.totalorder %s104, %s120
      %p122 = scmp.eq.s32.totalorder %s23, 0
      %p123 = por %p121, %p122
      %p124 = scmp.le.s32.totalorder 1, %s17
      %p125 = scmp.lt.s32.totalorder %s17, 3
      %p126 = pnand %p124, %p125
      %p127 = pneg %p126
      // Predicated region
      $region9: #{tpu_custom_call.1} parent=5 // pred_check
        _
      $region10: #{tpu_custom_call.1} parent=5 // pred_check_branch
        %129 = sbr.rel (%p126) target = $region12
      $region11: #{tpu_custom_call.1} parent=5 // pred_region
        %s130 = ssub.s32 %s17, 1
        // Predicated region
        $region13: #{tpu_custom_call.1} parent=11 // pred_check
          %p131 = pneg %p64
        $region14: #{tpu_custom_call.1} parent=11 // pred_check_branch
          %133 = sbr.rel (%p131) target = $region16
        $region15: #{tpu_custom_call.1} parent=11 // pred_region
          %135 = vsyncadd [#allocation3], 0
          %s136 = sshll.u32 %s1, 4
          %s137 = int_to_ptr.hbm [resolvable:$true] %s136
          %s138 = sshll.u32 [#allocation2], 4
          %s139 = int_to_ptr.vmem [resolvable:$true] %s138
          %144 = dma.hbm_to_vmem [thread:$0]  %s137, 384, %s139, [#allocation3], 128, 128, 8
        $region16: #{tpu_custom_call.1} parent=11 // pred_fallthru
          _
      $region12: #{tpu_custom_call.1} parent=5 // pred_fallthru
        _
      %p145 = scmp.lt.s32.totalorder %s17, 2
      // Predicated region
      $region17: #{tpu_custom_call.1} parent=5 // pred_check
        %p146 = pneg %p145
      $region18: #{tpu_custom_call.1} parent=5 // pred_check_branch
        %148 = sbr.rel (%p146) target = $region20
      $region19: #{tpu_custom_call.1} parent=5 // pred_region
        // Predicated region
        $region21: #{tpu_custom_call.1} parent=19 // pred_check
          %p149 = pneg %p37
        $region22: #{tpu_custom_call.1} parent=19 // pred_check_branch
          %151 = sbr.rel (%p149) target = $region24
        $region23: #{tpu_custom_call.1} parent=19 // pred_region
          %p152 = scmp.lt.s32.totalorder %s17, 1
          %s153 = scalar_select %p152, %s17, 1
          %s154 = smul.addr %s153, 8
          %s155 = scalar_lea.vmem %s0, %s154
        $region24: #{tpu_custom_call.1} parent=19 // pred_fallthru
          _
      $region20: #{tpu_custom_call.1} parent=5 // pred_fallthru
        _
      %p156 = scmp.le.s32.totalorder 1, %s17
      %p157 = scmp.lt.s32.totalorder %s17, 3
      %p158 = pnand %p156, %p157
      %p159 = pneg %p158
      // Predicated region
      $region25: #{tpu_custom_call.1} parent=5 // pred_check
        _
      $region26: #{tpu_custom_call.1} parent=5 // pred_check_branch
        %161 = sbr.rel (%p158) target = $region28
      $region27: #{tpu_custom_call.1} parent=5 // pred_region
        %s162 = ssub.s32 %s17, 1
        // Predicated region
        $region29: #{tpu_custom_call.1} parent=27 // pred_check
          %p163 = pneg %p64
        $region30: #{tpu_custom_call.1} parent=27 // pred_check_branch
          %165 = sbr.rel (%p163) target = $region32
        $region31: #{tpu_custom_call.1} parent=27 // pred_region
          %167 = dma.done [#allocation3], 384
        $region32: #{tpu_custom_call.1} parent=27 // pred_fallthru
          _
        %p168 = scmp.lt.s32.totalorder %s22, 1
        %s169 = scalar_select %p168, %s22, 1
        %s170 = smul.addr %s169, 8
        %s171 = scalar_lea.vmem %s0, %s170
        %p172 = pneg %p43
        %p173 = pneg %p40
        %p174 = pneg %p64
        %p175 = pneg %p61
        %p176 = pneg %p90
        %p177 = pneg %p87
        %s178 = sand.u32 %s77, 1
        %s179 = scalar_lea.sflag [#allocation4], %s178
        %s180 = sand.u32 %s77, 1
        %s181 = smul.addr %s180, 8
        %s182 = scalar_lea.vmem [#allocation5], %s181
        %p183 = pneg %p116
        %p184 = pneg %p113
        %s185 = sand.u32 %s103, 1
        %s186 = scalar_lea.sflag [#allocation7], %s185
        %s187 = sand.u32 %s103, 1
        %s188 = smul.addr %s187, 8
        %s189 = scalar_lea.vmem [#allocation6], %s188
        %p190 = scmp.lt.s32.totalorder %s22, 1
        %s191 = scalar_select %p190, %s22, 1
        %s192 = smul.addr %s191, 8
        %s193 = scalar_lea.vmem %s0, %s192
        %v194 = vld [vmem:[%s193] sm:$0xff]
        %v195 = vlaneseq
        %v196 = vand.u32 %v195, 127
        %197 = vset.pattern.permute.xlu0 0
        %198 = vperm.xlu0 %197, %v194
        %v199 = vpop.permute.xlu0 %198
        %vm200 = vcmp.eq.s32.totalorder %v196, %v199
        %v201 = vsel %vm200, 1, 0
        %v202 = vcvt.s32.f32 %v201
        %vm203 = vcmask 195584
        %204 = vst.msk [vmem:[%s189] sm:$0xff] %vm203, %v202
        %v205 = vld [vmem:[#allocation2] sm:$0xff]
        %v206 = vld [vmem:[#allocation2 + $0x8] sm:$0xff]
        %v207 = vld [vmem:[#allocation2 + $0x10] sm:$0xff]
        %v209 = vsel %vm203, %v202, 0
        %211 = vmatpush.msra.mxu0 0.0
        %212 = vmatpush.msra.mxu0 0.0
        %213 = vmatpush.msra.mxu0 0.0
        %214 = vmatpush.msra.mxu0 0.0
        %215 = vmatpush.msra.mxu0 0.0
        %216 = vmatpush.msra.mxu0 0.0
        %217 = vmatpush.msra.mxu0 0.0
        %218 = vmatpush.msra.mxu0 0.0
        %219 = vmatpush.msra.mxu0 0.0
        %220 = vmatpush.msra.mxu0 0.0
        %221 = vmatpush.msra.mxu0 0.0
        %222 = vmatpush.msra.mxu0 0.0
        %223 = vmatpush.msra.mxu0 0.0
        %224 = vmatpush.msra.mxu0 %v207
        %225 = vmatpush.msra.mxu0 %v206
        %226 = vmatpush.msra.mxu0 %v205
        %227 = vmatmul.f32.gmra.mxu0 %v209
        %v228 = vpop.f32.mrf.mxu0
        %v229 = vadd.f32 0.0, %v228
        %230 = vdwg.mxu0
        %vm231 = vcmask 261120
        %232 = vst.msk [vmem:[%s182] sm:$0xff] %vm231, %v229
        %s233 = sand.u32 %s77, 1
        %s234 = scalar_lea.sflag [#allocation4], %s233
        %s235 = sand.u32 %s77, 1
        %s236 = smul.addr %s235, 8
        %s237 = scalar_lea.vmem [#allocation5], %s236
        %s238 = sand.u32 %s103, 1
        %s239 = scalar_lea.sflag [#allocation7], %s238
        %s240 = sand.u32 %s103, 1
        %s241 = smul.addr %s240, 8
        %s242 = scalar_lea.vmem [#allocation6], %s241
        // Predicated region
        $region33: #{tpu_custom_call.1} parent=27 // pred_check
          %p243 = pneg %p87
        $region34: #{tpu_custom_call.1} parent=27 // pred_check_branch
          %245 = sbr.rel (%p243) target = $region36
        $region35: #{tpu_custom_call.1} parent=27 // pred_region
          %247 = vsyncadd %s234, 0
          %s248 = smul.addr %s22, 8
          %s249 = scalar_lea.hbm %s2, %s248
          %s251 = sshll.u32 %s237, 4
          %s252 = int_to_ptr.vmem [resolvable:$true] %s251
          %s253 = sshll.u32 %s249, 4
          %s254 = int_to_ptr.hbm [resolvable:$true] %s253
          %256 = dma.vmem_to_hbm [thread:$0]  %s252, 128, %s254, %s234
        $region36: #{tpu_custom_call.1} parent=27 // pred_fallthru
          _
        // Predicated region
        $region37: #{tpu_custom_call.1} parent=27 // pred_check
          %p257 = pneg %p113
        $region38: #{tpu_custom_call.1} parent=27 // pred_check_branch
          %259 = sbr.rel (%p257) target = $region40
        $region39: #{tpu_custom_call.1} parent=27 // pred_region
          %261 = vsyncadd %s239, 0
          %s262 = smul.addr %s22, 8
          %s263 = scalar_lea.hbm %s3, %s262
          %s265 = sshll.u32 %s242, 4
          %s266 = int_to_ptr.vmem [resolvable:$true] %s265
          %s267 = sshll.u32 %s263, 4
          %s268 = int_to_ptr.hbm [resolvable:$true] %s267
          %270 = dma.vmem_to_hbm [thread:$0]  %s266, 128, %s268, %s239
        $region40: #{tpu_custom_call.1} parent=27 // pred_fallthru
          _
      $region28: #{tpu_custom_call.1} parent=5 // pred_fallthru
        _
      %p271 = scmp.le.s32.totalorder 2, %s17
      // Predicated region
      $region41: #{tpu_custom_call.1} parent=5 // pred_check
        %p272 = pneg %p271
      $region42: #{tpu_custom_call.1} parent=5 // pred_check_branch
        %274 = sbr.rel (%p272) target = $region44
      $region43: #{tpu_custom_call.1} parent=5 // pred_region
        %s275 = ssub.s32 %s17, 2
        // Predicated region
        $region45: #{tpu_custom_call.1} parent=43 // pred_check
          %p276 = pneg %p93
        $region46: #{tpu_custom_call.1} parent=43 // pred_check_branch
          %278 = sbr.rel (%p276) target = $region48
        $region47: #{tpu_custom_call.1} parent=43 // pred_region
          %s279 = sand.u32 %s78, 1
          %s280 = scalar_lea.sflag [#allocation4], %s279
          %s281 = sand.u32 %s78, 1
          %s282 = smul.addr %s281, 8
          %s283 = scalar_lea.vmem [#allocation5], %s282
          %285 = dma.done %s280, 128
        $region48: #{tpu_custom_call.1} parent=43 // pred_fallthru
          _
        // Predicated region
        $region49: #{tpu_custom_call.1} parent=43 // pred_check
          %p286 = pneg %p119
        $region50: #{tpu_custom_call.1} parent=43 // pred_check_branch
          %288 = sbr.rel (%p286) target = $region52
        $region51: #{tpu_custom_call.1} parent=43 // pred_region
          %s289 = sand.u32 %s104, 1
          %s290 = scalar_lea.sflag [#allocation7], %s289
          %s291 = sand.u32 %s104, 1
          %s292 = smul.addr %s291, 8
          %s293 = scalar_lea.vmem [#allocation6], %s292
          %295 = dma.done %s290, 128
        $region52: #{tpu_custom_call.1} parent=43 // pred_fallthru
          _
      $region44: #{tpu_custom_call.1} parent=5 // pred_fallthru
        _
    $region6: #{tpu_custom_call.1} parent=1 // loop_footer
      %s21 = sadd.s32 1, %s17
    $region7: #{tpu_custom_call.1} parent=1 // loop_footer_branch
      %16 = sbr.rel target = $region3
    $region8: #{tpu_custom_call.1} parent=1 // loop_exit
      _
    %296 = vsyncpa [#allocation3], 1
    %s297 = scalar_lea.sflag [#allocation3], 1
    %298 = vsyncpa %s297, 1
    %299 = vsyncpa [#allocation4], 1
    %s300 = scalar_lea.sflag [#allocation4], 1
    %301 = vsyncpa %s300, 1
    %302 = vsyncpa [#allocation7], 1
    %s303 = scalar_lea.sflag [#allocation7], 1
    %304 = vsyncpa %s303, 1

</llo_original>
